<compile_context>
chip_gen: v7x
topology: tpu7x:2x2x1
jax: 0.10.0
libtpu: 0.0.40
codegen_flags: <defaults>
</compile_context>

<pallas_src>
import functools

import jax
import jax.numpy as jnp
from jax.experimental import pallas as pl
from jax.experimental.pallas import tpu as pltpu


def _round_up(x, m):
    return ((x + m - 1) // m) * m


def _projector_kernel(x_ref, w1_ref, b1_ref, w2_ref, b2_ref, o_ref):
    # Cast the activation tile to the weight compute dtype (bf16) on the VPU;
    # this replaces the old wrapper-side HBM cast pass and is hidden under MXU.
    x = x_ref[...].astype(w1_ref.dtype)
    # fc1: (TB, in_dim) @ (in_dim, in_p) -> f32 accumulate, +bias, ReLU.
    h = jnp.dot(x, w1_ref[...], preferred_element_type=jnp.float32)
    h = jnp.maximum(h + b1_ref[...], 0.0)
    # fc2: (TB, in_p) @ (in_p, out_p) -> f32 accumulate, +bias.
    # NOTE: h is downcast to bf16 before the second matmul (intentional,
    # acceptable precision tradeoff for a SimCLR projector).
    y = jnp.dot(h.astype(w2_ref.dtype), w2_ref[...],
                preferred_element_type=jnp.float32)
    o_ref[...] = (y + b2_ref[...]).astype(o_ref.dtype)


@functools.partial(jax.jit, static_argnames=("block_b", "compute_dtype"))
def projector_simclr(x, w1, b1, w2, b2, *, block_b=512,
                     compute_dtype=jnp.bfloat16):
    """SimCLR projector forward.

    x:  (B, in_dim)          (streamed in its native dtype)
    w1: (in_dim, in_dim)     (stored pre-transposed: (in_features, out_features))
    b1: (in_dim,)
    w2: (in_dim, out_dim)    (stored pre-transposed)
    b2: (out_dim,)
    Returns (B, out_dim) in x.dtype.
    """
    B, in_dim = x.shape
    out_dim = w2.shape[1]

    in_p = _round_up(in_dim, 128)
    out_p = _round_up(out_dim, 128)

    # Weights / biases: cast + pad once in the wrapper (tiny vs. the batch).
    # Padding keeps the intermediate h and the output lane-aligned; padded
    # columns/rows are exactly zero through the whole pipeline.
    w1c = w1.astype(compute_dtype)
    w2c = w2.astype(compute_dtype)
    b1f = b1.astype(jnp.float32)
    b2f = b2.astype(jnp.float32)
    if in_p != in_dim:
        w1c = jnp.pad(w1c, ((0, 0), (0, in_p - in_dim)))   # fc1 output cols
        b1f = jnp.pad(b1f, (0, in_p - in_dim))
        w2c = jnp.pad(w2c, ((0, in_p - in_dim), (0, 0)))    # fc2 input rows
    if out_p != out_dim:
        w2c = jnp.pad(w2c, ((0, 0), (0, out_p - out_dim)))
        b2f = jnp.pad(b2f, (0, out_p - out_dim))
    b1_2d = b1f.reshape(1, in_p)
    b2_2d = b2f.reshape(1, out_p)

    # Batch tiling: large tiles amortize per-grid-step overhead; cap so the
    # grid has >= 2 steps when possible (keeps both v7x TensorCores busy).
    tb = max(8, min(_round_up(block_b, 8),
                    _round_up(pl.cdiv(B, 2), 8),
                    _round_up(B, 8)))
    grid = (pl.cdiv(B, tb),)

    # --- VMEM budget: actual requirement + headroom, capped below physical ---
    wb = jnp.dtype(compute_dtype).itemsize
    xb = jnp.dtype(x.dtype).itemsize
    needed = (
        in_dim * in_p * wb                 # w1 (single-buffered)
        + in_p * out_p * wb                # w2 (single-buffered)
        + (in_p + out_p) * 4               # biases (f32)
        + 2 * tb * in_dim * xb             # x tile, double-buffered
        + 2 * tb * out_p * xb              # out tile, double-buffered
        + tb * in_dim * wb                 # in-kernel x cast temp
        + tb * in_p * (4 + wb)             # h (f32) + h bf16 cast temp
        + tb * out_p * 4                   # y (f32)
    )
    try:
        phys_vmem = pltpu.get_tpu_info().vmem_capacity_bytes
    except Exception:
        phys_vmem = 64 * 1024 * 1024       # conservative: v7x per-TC capacity
    vmem_limit = int(min(needed + 16 * 1024 * 1024,
                         phys_vmem - 8 * 1024 * 1024))

    flops = 2 * B * in_dim * in_p + 2 * B * in_p * out_p
    bytes_accessed = (B * in_dim * xb + B * out_p * xb
                      + in_dim * in_p * wb + in_p * out_p * wb
                      + (in_p + out_p) * 4)

    out_padded = pl.pallas_call(
        _projector_kernel,
        out_shape=jax.ShapeDtypeStruct((B, out_p), x.dtype),
        grid=grid,
        in_specs=[
            # activation tile moves with the grid index (native dtype, no pad)
            pl.BlockSpec((tb, in_dim), lambda i: (i, 0)),
            # weights / biases: constant index -> VMEM-resident across all
            # batch tiles; single-buffered (never re-fetched).
            pl.BlockSpec((in_dim, in_p), lambda i: (0, 0),
                         pipeline_mode=pl.Buffered(1)),
            pl.BlockSpec((1, in_p), lambda i: (0, 0),
                         pipeline_mode=pl.Buffered(1)),
            pl.BlockSpec((in_p, out_p), lambda i: (0, 0),
                         pipeline_mode=pl.Buffered(1)),
            pl.BlockSpec((1, out_p), lambda i: (0, 0),
                         pipeline_mode=pl.Buffered(1)),
        ],
        out_specs=pl.BlockSpec((tb, out_p), lambda i: (i, 0)),
        compiler_params=pltpu.CompilerParams(
            # batch tiles are independent -> shard across TCs on v7x
            dimension_semantics=("parallel",),
            vmem_limit_bytes=vmem_limit,
        ),
        cost_estimate=pl.CostEstimate(flops=flops, transcendentals=0,
                                      bytes_accessed=bytes_accessed),
    )(x, w1c, b1_2d, w2c, b2_2d)

    if out_p != out_dim:
        out_padded = out_padded[:, :out_dim]
    return out_padded


if __name__ == "__main__":
    # Small shapes consistent with the module: projector on a (B, in_dim) feature.
    B, in_dim, out_dim = 8, 32, 16

    key = jax.random.PRNGKey(0)
    kx, kw1, kb1, kw2, kb2 = jax.random.split(key, 5)

    x = jax.random.normal(kx, (B, in_dim), dtype=jnp.float32)

    # Deterministic param init mimicking nn.Linear's U(-1/sqrt(fan_in), 1/sqrt(fan_in)).
    # Weights stored pre-transposed as (in_features, out_features).
    bound1 = 1.0 / jnp.sqrt(in_dim)
    w1 = jax.random.uniform(kw1, (in_dim, in_dim), jnp.float32, -bound1, bound1)
    b1 = jax.random.uniform(kb1, (in_dim,), jnp.float32, -bound1, bound1)
    bound2 = 1.0 / jnp.sqrt(in_dim)
    w2 = jax.random.uniform(kw2, (in_dim, out_dim), jnp.float32, -bound2, bound2)
    b2 = jax.random.uniform(kb2, (out_dim,), jnp.float32, -bound2, bound2)

    out = projector_simclr(x, w1, b1, w2, b2)
    out = jax.block_until_ready(out)
    assert out.shape == (B, out_dim)

    # Reference with the same bf16-input / f32-accumulate precision choices
    # as the kernel (tight tolerance).
    def q(a):
        return a.astype(jnp.bfloat16).astype(jnp.float32)

    h_ref = jnp.maximum(q(x) @ q(w1) + b1, 0.0)
    ref_bf16 = q(h_ref) @ q(w2) + b2
    assert jnp.allclose(out, ref_bf16, atol=2e-3, rtol=2e-3)

    # Sanity check vs the full-f32 PyTorch-equivalent forward (loose tolerance,
    # reflecting the intentional bf16 compute dtype).
    ref_f32 = jnp.maximum(x @ w1 + b1, 0.0) @ w2 + b2
    assert jnp.allclose(out, ref_f32, atol=5e-2, rtol=5e-2)

    print("KERNEL_OK")
</pallas_src>

<mosaic_0001>
module attributes {stable_mosaic.version = 11 : i64} {
  func.func @_projector_kernel(%arg0: i32, %arg1: memref<8x32xf32, #tpu.memory_space<vmem>>, %arg2: memref<32x128xbf16, #tpu.memory_space<vmem>>, %arg3: memref<1x128xf32, #tpu.memory_space<vmem>>, %arg4: memref<128x128xbf16, #tpu.memory_space<vmem>>, %arg5: memref<1x128xf32, #tpu.memory_space<vmem>>, %arg6: memref<8x128xf32, #tpu.memory_space<vmem>>) attributes {dimension_semantics = [#tpu.dimension_semantics<parallel>], iteration_bounds = array<i64: 1>, scalar_prefetch = 0 : i64, scratch_operands = 0 : i64, tpu.core_type = #tpu.core_type<tc>, window_params = [{transform_indices = @transform_0, window_bounds = array<i64: 8, 32>}, {pipeline_mode = #tpu.pipeline_mode<synchronous>, transform_indices = @transform_1, window_bounds = array<i64: 32, 128>}, {pipeline_mode = #tpu.pipeline_mode<synchronous>, transform_indices = @transform_2, window_bounds = array<i64: 1, 128>}, {pipeline_mode = #tpu.pipeline_mode<synchronous>, transform_indices = @transform_3, window_bounds = array<i64: 128, 128>}, {pipeline_mode = #tpu.pipeline_mode<synchronous>, transform_indices = @transform_4, window_bounds = array<i64: 1, 128>}, {transform_indices = @transform_5, window_bounds = array<i64: 8, 128>}]} {
    %c0 = arith.constant 0 : index
    %c0_0 = arith.constant 0 : index
    %0 = vector.load %arg1[%c0, %c0_0] : memref<8x32xf32, #tpu.memory_space<vmem>>, vector<8x32xf32>
    %1 = arith.truncf %0 : vector<8x32xf32> to vector<8x32xbf16>
    %c0_1 = arith.constant 0 : index
    %c0_2 = arith.constant 0 : index
    %2 = vector.load %arg2[%c0_1, %c0_2] : memref<32x128xbf16, #tpu.memory_space<vmem>>, vector<32x128xbf16>
    %cst = arith.constant dense<0.000000e+00> : vector<8x128xf32>
    %3 = tpu.matmul %1, %2, %cst {dimension_numbers = #tpu.dot_dimension_numbers<[1], [0], [0], [1], [0, 0, 1, 1], [], []>} : vector<8x32xbf16>, vector<32x128xbf16>, vector<8x128xf32> -> vector<8x128xf32>
    %c0_3 = arith.constant 0 : index
    %c0_4 = arith.constant 0 : index
    %4 = vector.load %arg3[%c0_3, %c0_4] : memref<1x128xf32, #tpu.memory_space<vmem>>, vector<1x128xf32>
    %5 = vector.broadcast %4 : vector<1x128xf32> to vector<8x128xf32>
    %6 = arith.addf %3, %5 : vector<8x128xf32>
    %cst_5 = arith.constant 0.000000e+00 : f32
    %7 = vector.broadcast %cst_5 : f32 to vector<8x128xf32>
    %8 = arith.maximumf %6, %7 : vector<8x128xf32>
    %9 = arith.truncf %8 : vector<8x128xf32> to vector<8x128xbf16>
    %c0_6 = arith.constant 0 : index
    %c0_7 = arith.constant 0 : index
    %10 = vector.load %arg4[%c0_6, %c0_7] : memref<128x128xbf16, #tpu.memory_space<vmem>>, vector<128x128xbf16>
    %cst_8 = arith.constant dense<0.000000e+00> : vector<8x128xf32>
    %11 = tpu.matmul %9, %10, %cst_8 {dimension_numbers = #tpu.dot_dimension_numbers<[1], [0], [0], [1], [0, 0, 1, 1], [], []>} : vector<8x128xbf16>, vector<128x128xbf16>, vector<8x128xf32> -> vector<8x128xf32>
    %c0_9 = arith.constant 0 : index
    %c0_10 = arith.constant 0 : index
    %12 = vector.load %arg5[%c0_9, %c0_10] : memref<1x128xf32, #tpu.memory_space<vmem>>, vector<1x128xf32>
    %13 = vector.broadcast %12 : vector<1x128xf32> to vector<8x128xf32>
    %14 = arith.addf %11, %13 : vector<8x128xf32>
    %c0_11 = arith.constant 0 : index
    %c0_12 = arith.constant 0 : index
    %15 = vector.load %arg6[%c0_11, %c0_12] : memref<8x128xf32, #tpu.memory_space<vmem>>, vector<8x128xf32>
    tpu.vector_store %arg6[%c0_11, %c0_12], %14 {strides = array<i32>} : memref<8x128xf32, #tpu.memory_space<vmem>>, vector<8x128xf32>,
    return
  }
  func.func @transform_0(%arg0: i32) -> (i32, i32) {
    %c0_i32 = arith.constant 0 : i32
    %c0_i32_0 = arith.constant 0 : i32
    return %arg0, %c0_i32 : i32, i32
  }
  func.func @transform_1(%arg0: i32) -> (i32, i32) {
    %c0_i32 = arith.constant 0 : i32
    %c0_i32_0 = arith.constant 0 : i32
    %c0_i32_1 = arith.constant 0 : i32
    return %c0_i32, %c0_i32_0 : i32, i32
  }
  func.func @transform_2(%arg0: i32) -> (i32, i32) {
    %c0_i32 = arith.constant 0 : i32
    %c0_i32_0 = arith.constant 0 : i32
    %c0_i32_1 = arith.constant 0 : i32
    return %c0_i32, %c0_i32_0 : i32, i32
  }
  func.func @transform_3(%arg0: i32) -> (i32, i32) {
    %c0_i32 = arith.constant 0 : i32
    %c0_i32_0 = arith.constant 0 : i32
    %c0_i32_1 = arith.constant 0 : i32
    return %c0_i32, %c0_i32_0 : i32, i32
  }
  func.func @transform_4(%arg0: i32) -> (i32, i32) {
    %c0_i32 = arith.constant 0 : i32
    %c0_i32_0 = arith.constant 0 : i32
    %c0_i32_1 = arith.constant 0 : i32
    return %c0_i32, %c0_i32_0 : i32, i32
  }
  func.func @transform_5(%arg0: i32) -> (i32, i32) {
    %c0_i32 = arith.constant 0 : i32
    %c0_i32_0 = arith.constant 0 : i32
    return %arg0, %c0_i32 : i32, i32
  }
}

</mosaic_0001>

<llo_original>
// kernel: projector_simclr.1
$region0: #{projector_simclr.1}
  #allocation0 [shape = 'u32[]', space=smem, size = 0x4, offset = 0x4, fixed_abs, tag = 'smem constant byte address 0x4 - core index']
  #allocation1 [shape = 'u32[144,128]{1,0:T(1,128)}', space=vmem, size = 0x12000, scoped, tag = 'internal scratch']
  %s0 = inlined_call_operand.vmem [shape: f32[8,32], index: 0, kind: input, shape index: {}]
  %s1 = inlined_call_operand.vmem [shape: bf16[32,128], index: 1, kind: input, shape index: {}]
  %s2 = inlined_call_operand.vmem [shape: f32[1,128], index: 2, kind: input, shape index: {}]
  %s3 = inlined_call_operand.vmem [shape: bf16[128,128], index: 3, kind: input, shape index: {}]
  %s4 = inlined_call_operand.vmem [shape: f32[1,128], index: 4, kind: input, shape index: {}]
  %s5 = inlined_call_operand.hbm [shape: f32[8,128], index: 5, kind: output, shape index: {}]
  %s6 = sld [smem:[#allocation0]]
  $region30: #{projector_simclr.1} parent=0
    _
  %s8 = ssub.s32 1, %s6
  %s9 = scalar_select 0, %s8, %s6
  $region1: #{projector_simclr.1} parent=0
    #allocation2 [shape = 'u8[4096]{0}', space=vmem, size = 0x1000, scoped, tag = 'output window, operand 0, single buffered']
    #allocation3 [shape = 's32[1]{0}', space=sflag, size = 0x4, scoped, tag = 'scoped memory for projector_simclr.1']
    %10 = vsyncpa [#allocation3], 0
    // Predicated region
    $region2: #{projector_simclr.1} parent=1 // pred_check
      _
    $region3: #{projector_simclr.1} parent=1 // pred_check_branch
      %12 = sbr.rel (0) target = $region5
    $region4: #{projector_simclr.1} parent=1 // pred_region
      _
    $region5: #{projector_simclr.1} parent=1 // pred_fallthru
      _
    // Predicated region
    $region6: #{projector_simclr.1} parent=1 // pred_check
      _
    $region7: #{projector_simclr.1} parent=1 // pred_check_branch
      %14 = sbr.rel (0) target = $region9
    $region8: #{projector_simclr.1} parent=1 // pred_region
      _
    $region9: #{projector_simclr.1} parent=1 // pred_fallthru
      _
    // Predicated region
    $region10: #{projector_simclr.1} parent=1 // pred_check
      _
    $region11: #{projector_simclr.1} parent=1 // pred_check_branch
      %16 = sbr.rel (0) target = $region13
    $region12: #{projector_simclr.1} parent=1 // pred_region
      _
    $region13: #{projector_simclr.1} parent=1 // pred_fallthru
      _
    // Predicated region
    $region14: #{projector_simclr.1} parent=1 // pred_check
      _
    $region15: #{projector_simclr.1} parent=1 // pred_check_branch
      %18 = sbr.rel (0) target = $region17
    $region16: #{projector_simclr.1} parent=1 // pred_region
      _
    $region17: #{projector_simclr.1} parent=1 // pred_fallthru
      _
    // Predicated region
    $region18: #{projector_simclr.1} parent=1 // pred_check
      _
    $region19: #{projector_simclr.1} parent=1 // pred_check_branch
      %20 = sbr.rel (0) target = $region21
    $region20: #{projector_simclr.1} parent=1 // pred_region
      _
    $region21: #{projector_simclr.1} parent=1 // pred_fallthru
      _
    %v22 = vld [vmem:[%s0] sm:$0xff]
    %v23 = vpack.c.bf16 %v22, %v22
    %v24 = vld [vmem:[%s1] sm:$0xf]
    %v25 = vld [vmem:[%s1 + $0x4] sm:$0xf]
    %v26 = vld [vmem:[%s1 + $0x8] sm:$0xf]
    %v27 = vld [vmem:[%s1 + $0xc] sm:$0xf]
    %v28 = vld [vmem:[%s2] sm:$0x1]
    %v30 = vlaneseq
    %v31 = vshrl.u32 %v30, 7
    %v32 = vsub.s32 0, %v31
    %v33 = vrot.slane %v28, %v32
    %v39 = vunpack.c.l.b16 %v24
    %v40 = vunpack.c.l.b16 %v25
    %v41 = vunpack.c.l.b16 %v26
    %v42 = vunpack.c.l.b16 %v27
    %v43 = vpack.c.b16 %v40, %v39
    %v44 = vpack.c.b16 %v42, %v41
    %vm47 = vcmask 261120
    %v49 = vsel %vm47, %v23, 0
    %51 = vmatprep.subr.bf16.mxu0 0
    %52 = vmatpush1.bf16.msra.mxu0 %v43
    %53 = vmatprep.subr.bf16.mxu0 0
    %54 = vmatpush1.bf16.msra.mxu0 %v44
    %55 = vmatprep.subr.bf16.mxu0 0
    %56 = vmatpush1.bf16.msra.mxu0 0
    %57 = vmatprep.subr.bf16.mxu0 0
    %58 = vmatpush1.bf16.msra.mxu0 0
    %59 = vmatprep.subr.bf16.mxu0 0
    %60 = vmatpush1.bf16.msra.mxu0 0
    %61 = vmatprep.subr.bf16.mxu0 0
    %62 = vmatpush1.bf16.msra.mxu0 0
    %63 = vmatprep.subr.bf16.mxu0 0
    %64 = vmatpush1.bf16.msra.mxu0 0
    %65 = vmatprep.subr.bf16.mxu0 0
    %66 = vmatpush1.bf16.msra.mxu0 0
    %67 = vmatprep.subr.bf16.mxu0 0
    %68 = vmatpush1.bf16.msra.mxu0 0
    %69 = vmatprep.subr.bf16.mxu0 0
    %70 = vmatpush1.bf16.msra.mxu0 0
    %71 = vmatprep.subr.bf16.mxu0 0
    %72 = vmatpush1.bf16.msra.mxu0 0
    %73 = vmatprep.subr.bf16.mxu0 0
    %74 = vmatpush1.bf16.msra.mxu0 0
    %75 = vmatprep.subr.bf16.mxu0 0
    %76 = vmatpush1.bf16.msra.mxu0 0
    %77 = vmatprep.subr.bf16.mxu0 0
    %78 = vmatpush1.bf16.msra.mxu0 0
    %79 = vmatprep.subr.bf16.mxu0 0
    %80 = vmatpush1.bf16.msra.mxu0 0
    %81 = vmatprep.subr.bf16.mxu0 0
    %82 = vmatpush1.bf16.msra.mxu0 0
    %83 = vmatprep.mubr.bf16.mxu0 0
    %84 = vmatmul.mubr.bf16.gmra.mrb[0].mxu0 %v49
    %v85 = vpop.f32.mrb[0].mxu0
    %v86 = vadd.f32 %v33, %v85
    %v87 = vpop.f32.mrb[0].mxu0
    %v88 = vpop.f32.mrb[0].mxu0
    %v89 = vpop.f32.mrb[0].mxu0
    %90 = vdwg.mxu0
    %v91 = vmax.f32 %v86, 0.0
    %v92 = vpack.c.bf16 %v91, %v91
    %v93 = vld [vmem:[%s3] sm:$0xf]
    %v94 = vld [vmem:[%s3 + $0x4] sm:$0xf]
    %v95 = vld [vmem:[%s3 + $0x8] sm:$0xf]
    %v96 = vld [vmem:[%s3 + $0xc] sm:$0xf]
    %v97 = vld [vmem:[%s3 + $0x10] sm:$0xf]
    %v98 = vld [vmem:[%s3 + $0x14] sm:$0xf]
    %v99 = vld [vmem:[%s3 + $0x18] sm:$0xf]
    %v100 = vld [vmem:[%s3 + $0x1c] sm:$0xf]
    %v101 = vld [vmem:[%s3 + $0x20] sm:$0xf]
    %v102 = vld [vmem:[%s3 + $0x24] sm:$0xf]
    %v103 = vld [vmem:[%s3 + $0x28] sm:$0xf]
    %v104 = vld [vmem:[%s3 + $0x2c] sm:$0xf]
    %v105 = vld [vmem:[%s3 + $0x30] sm:$0xf]
    %v106 = vld [vmem:[%s3 + $0x34] sm:$0xf]
    %v107 = vld [vmem:[%s3 + $0x38] sm:$0xf]
    %v108 = vld [vmem:[%s3 + $0x3c] sm:$0xf]
    %v109 = vld [vmem:[%s4] sm:$0x1]
    %v111 = vlaneseq
    %v112 = vshrl.u32 %v111, 7
    %v113 = vsub.s32 0, %v112
    %v114 = vrot.slane %v109, %v113
    %v132 = vunpack.c.l.b16 %v93
    %v133 = vunpack.c.l.b16 %v94
    %v134 = vunpack.c.l.b16 %v95
    %v135 = vunpack.c.l.b16 %v96
    %v136 = vunpack.c.l.b16 %v97
    %v137 = vunpack.c.l.b16 %v98
    %v138 = vunpack.c.l.b16 %v99
    %v139 = vunpack.c.l.b16 %v100
    %v140 = vunpack.c.l.b16 %v101
    %v141 = vunpack.c.l.b16 %v102
    %v142 = vunpack.c.l.b16 %v103
    %v143 = vunpack.c.l.b16 %v104
    %v144 = vunpack.c.l.b16 %v105
    %v145 = vunpack.c.l.b16 %v106
    %v146 = vunpack.c.l.b16 %v107
    %v147 = vunpack.c.l.b16 %v108
    %v148 = vpack.c.b16 %v133, %v132
    %v149 = vpack.c.b16 %v135, %v134
    %v150 = vpack.c.b16 %v137, %v136
    %v151 = vpack.c.b16 %v139, %v138
    %v152 = vpack.c.b16 %v141, %v140
    %v153 = vpack.c.b16 %v143, %v142
    %v154 = vpack.c.b16 %v145, %v144
    %v155 = vpack.c.b16 %v147, %v146
    %164 = vmatprep.subr.bf16.mxu0 0
    %165 = vmatpush1.bf16.msra.mxu0 %v148
    %166 = vmatprep.subr.bf16.mxu0 0
    %167 = vmatpush1.bf16.msra.mxu0 %v149
    %168 = vmatprep.subr.bf16.mxu0 0
    %169 = vmatpush1.bf16.msra.mxu0 %v150
    %170 = vmatprep.subr.bf16.mxu0 0
    %171 = vmatpush1.bf16.msra.mxu0 %v151
    %172 = vmatprep.subr.bf16.mxu0 0
    %173 = vmatpush1.bf16.msra.mxu0 %v152
    %174 = vmatprep.subr.bf16.mxu0 0
    %175 = vmatpush1.bf16.msra.mxu0 %v153
    %176 = vmatprep.subr.bf16.mxu0 0
    %177 = vmatpush1.bf16.msra.mxu0 %v154
    %178 = vmatprep.subr.bf16.mxu0 0
    %179 = vmatpush1.bf16.msra.mxu0 %v155
    %180 = vmatprep.subr.bf16.mxu0 0
    %181 = vmatpush1.bf16.msra.mxu0 0
    %182 = vmatprep.subr.bf16.mxu0 0
    %183 = vmatpush1.bf16.msra.mxu0 0
    %184 = vmatprep.subr.bf16.mxu0 0
    %185 = vmatpush1.bf16.msra.mxu0 0
    %186 = vmatprep.subr.bf16.mxu0 0
    %187 = vmatpush1.bf16.msra.mxu0 0
    %188 = vmatprep.subr.bf16.mxu0 0
    %189 = vmatpush1.bf16.msra.mxu0 0
    %190 = vmatprep.subr.bf16.mxu0 0
    %191 = vmatpush1.bf16.msra.mxu0 0
    %192 = vmatprep.subr.bf16.mxu0 0
    %193 = vmatpush1.bf16.msra.mxu0 0
    %194 = vmatprep.subr.bf16.mxu0 0
    %195 = vmatpush1.bf16.msra.mxu0 0
    %196 = vmatprep.mubr.bf16.mxu0 0
    %197 = vmatmul.mubr.bf16.gmra.mrb[0].mxu0 %v92
    %v198 = vpop.f32.mrb[0].mxu0
    %v199 = vadd.f32 %v114, %v198
    %v200 = vpop.f32.mrb[0].mxu0
    %v201 = vpop.f32.mrb[0].mxu0
    %v202 = vpop.f32.mrb[0].mxu0
    %203 = vdwg.mxu0
    %204 = vst [vmem:[#allocation2] sm:$0xff] %v199
    // Predicated region
    $region22: #{projector_simclr.1} parent=1 // pred_check
      _
    $region23: #{projector_simclr.1} parent=1 // pred_check_branch
      %206 = sbr.rel (0) target = $region25
    $region24: #{projector_simclr.1} parent=1 // pred_region
      %s208 = ssub.s32 128, 128
      %209 = vsyncadd [#allocation3], %s208
      %s211 = sshll.u32 [#allocation2], 4
      %s212 = int_to_ptr.vmem [resolvable:$true] %s211
      %214 = dma.vmem_to_hbm [thread:$0]  %s212, 128, %s5, [#allocation3]
    $region25: #{projector_simclr.1} parent=1 // pred_fallthru
      _
    // Predicated region
    $region26: #{projector_simclr.1} parent=1 // pred_check
      _
    $region27: #{projector_simclr.1} parent=1 // pred_check_branch
      %216 = sbr.rel (0) target = $region29
    $region28: #{projector_simclr.1} parent=1 // pred_region
      %217 = dma.done [#allocation3], 128
    $region29: #{projector_simclr.1} parent=1 // pred_fallthru
      _
    %218 = vsyncpa [#allocation3], 1

</llo_original>
